<compile_context>
chip_gen: v5e
topology: v5e:2x2
jax: 0.10.0
libtpu: 0.0.40
codegen_flags: <defaults>
</compile_context>

<pallas_src>
import functools

import jax
import jax.numpy as jnp
from jax.experimental import pallas as pl
from jax.experimental.pallas import tpu as pltpu


def _round_up(x, m):
    return (x + m - 1) // m * m


def _cdiv(a, b):
    return (a + b - 1) // b


def _tpu_generation():
    try:
        kind = jax.devices()[0].device_kind  # e.g. "TPU v5 lite", "TPU v6e", "TPU7x"
    except Exception:
        return 6
    for ch in kind:
        if ch.isdigit():
            return int(ch)
    return 6


def _vmem_capacity_bytes():
    try:
        return int(pltpu.get_tpu_info().vmem_capacity_bytes)
    except Exception:
        # Conservative fallback: the smallest per-core VMEM of current parts (v7x = 64 MiB).
        return 64 * 1024 * 1024


def _pow_gamma(omp, gamma):
    # omp >= 0 by construction (ce clamped at 0 -> pt <= 1).
    if gamma == 1.5:
        return omp * jnp.sqrt(omp)            # fast path: no log/exp pair
    if gamma == 2.0:
        return omp * omp
    if gamma == 1.0:
        return omp
    if gamma == 0.0:
        return jnp.ones_like(omp)
    return jnp.where(omp > 0.0,
                     jnp.exp(gamma * jnp.log(jnp.maximum(omp, 1e-30))),
                     0.0)


def _focal_loss_kernel(logits_ref, picked_ref, out_ref, m_ref, s_ref,
                       *, gamma, c_total, tile_c, mask_cols, exp_in_bf16):
    j = pl.program_id(1)

    @pl.when(j == 0)
    def _init():
        m_ref[...] = jnp.full_like(m_ref, -jnp.inf)   # running row max
        s_ref[...] = jnp.zeros_like(s_ref)            # running exp-sum

    # HBM->VMEM moved this block in its native dtype (bf16 stays bf16 on the wire);
    # the f32 cast happens per tile inside the kernel.
    x = logits_ref[...].astype(jnp.float32)           # (TILE_N, TILE_C)

    if mask_cols:
        # Ragged C handled in-kernel (no wrapper-side pad copy): columns >= C -> -inf,
        # applied *before* the block max so garbage lanes can never win.
        lane = jax.lax.broadcasted_iota(jnp.int32, x.shape, 1)
        x = jnp.where(lane < (c_total - j * tile_c), x, -jnp.inf)

    # Online (flash-style) log-sum-exp over the C tiles.
    bmax = jnp.max(x, axis=-1, keepdims=True)
    m_old = m_ref[...]
    m_new = jnp.maximum(m_old, bmax)
    alpha = jnp.exp(m_old - m_new)
    z = x - m_new
    if exp_in_bf16:
        # v7x: the single EUP (not HBM) is the binding slot; bf16 exp ~doubles it.
        e = jnp.exp(z.astype(jnp.bfloat16)).astype(jnp.float32)
    else:
        e = jnp.exp(z)
    s_ref[...] = alpha * s_ref[...] + jnp.sum(e, axis=-1, keepdims=True)
    m_ref[...] = m_new

    @pl.when(j == pl.num_programs(1) - 1)
    def _finalize():
        lse = jnp.log(s_ref[...]) + m_ref[...]        # (TILE_N, 1)
        # picked_ref holds logits[row, target[row]] (f32), or +inf for ignored rows,
        # so ce clamps to exactly 0 there (tiny negative fp rounding also clamps to 0).
        ce = jnp.maximum(lse - picked_ref[...], 0.0)
        pt = jnp.exp(-ce)
        omp = 1.0 - pt
        out_ref[...] = _pow_gamma(omp, gamma) * ce


def focal_loss(logits, target, gamma=1.5, ignore_index=-100, *,
               tile_n=None, tile_c=None, exp_in_bf16=None):
    """Pallas implementation of FocalLoss.forward for 2-D logits [N, C].

    weight=None (the module default) — per-class weighting not applied.
    """
    # TODO(synk): per-class `weight` tensor (module default is None) not implemented.
    N, C = logits.shape
    itemsize = jnp.dtype(logits.dtype).itemsize
    gen = _tpu_generation()

    if exp_in_bf16 is None:
        exp_in_bf16 = (gen >= 7) and (logits.dtype == jnp.bfloat16)

    # ---- tile_c: full C when modest; else balanced, (8,128)-legal tiles --------------
    if tile_c is None:
        if C <= 2048:
            tile_c = C
        else:
            tile_c = _round_up(_cdiv(C, _cdiv(C, 2048)), 128)
    tile_c = min(tile_c, C) if tile_c >= C else tile_c
    if tile_c != C and tile_c % 128 != 0:
        raise ValueError("tile_c must be a multiple of 128 (or equal to C)")
    mask_cols = (C % tile_c) != 0
    grid_c = _cdiv(C, tile_c)

    # ---- VMEM budget (generation-aware; derived from the actual part) ----------------
    vmem_cap = _vmem_capacity_bytes()
    vmem_limit = max(32 * 1024 * 1024, min(96 * 1024 * 1024, vmem_cap - 24 * 1024 * 1024))

    # ---- tile_n -----------------------------------------------------------------------
    if tile_n is None:
        per_elem = 2 * itemsize + 12          # double-buffered logits block + ~3x f32 temps
        per_row = 6 * 512                     # lane-padded (tile_n,1) f32 buffers (m,s,picked,out)
        budget = int(vmem_limit * 0.6)
        block_cap = (3 if gen >= 7 else 8) * 1024 * 1024   # target logits block size
        tile_n = min(budget // (tile_c * per_elem + per_row),
                     block_cap // max(1, tile_c * itemsize),
                     8192)
        if gen >= 7 and N > 8:
            # Keep >= 2 N-blocks so the "parallel" axis actually splits across both TCs.
            tile_n = min(tile_n, _round_up(_cdiv(N, 2), 8))
    tile_n = min(tile_n, _round_up(N, 8))
    tile_n = max(8, (tile_n // 8) * 8)
    grid_n = _cdiv(N, tile_n)

    # ---- tiny per-row gather in the wrapper (replaces the in-kernel one-hot sweep) ----
    tgt = target.astype(jnp.int32)
    valid = tgt != ignore_index
    safe_tgt = jnp.where(valid, tgt, 0)
    picked = jnp.take_along_axis(logits, safe_tgt[:, None], axis=1).astype(jnp.float32)
    picked_eff = jnp.where(valid[:, None], picked, jnp.inf)   # +inf -> ce == 0 for ignored rows

    kernel = functools.partial(
        _focal_loss_kernel,
        gamma=float(gamma), c_total=C, tile_c=tile_c,
        mask_cols=mask_cols, exp_in_bf16=bool(exp_in_bf16),
    )
    per_row = pl.pallas_call(
        kernel,
        out_shape=jax.ShapeDtypeStruct((N, 1), jnp.float32),
        grid_spec=pltpu.PrefetchScalarGridSpec(
            num_scalar_prefetch=0,
            grid=(grid_n, grid_c),
            in_specs=[
                pl.BlockSpec((tile_n, tile_c), lambda i, j: (i, j)),   # logits tile
                pl.BlockSpec((tile_n, 1), lambda i, j: (i, 0)),        # picked target logit
            ],
            out_specs=pl.BlockSpec((tile_n, 1), lambda i, j: (i, 0)),  # per-row focal value
            scratch_shapes=[
                pltpu.VMEM((tile_n, 1), jnp.float32),  # running max
                pltpu.VMEM((tile_n, 1), jnp.float32),  # running exp-sum
            ],
        ),
        compiler_params=pltpu.CompilerParams(
            # N blocks are independent -> shard across TCs on v7x; the C axis carries the
            # online-LSE state -> keep it serial ("arbitrary") and last in the grid.
            dimension_semantics=("parallel", "arbitrary"),
            vmem_limit_bytes=int(vmem_limit),
        ),
    )(logits, picked_eff)

    # torch .mean(): divide by total N (ignored rows contribute 0 but still count).
    return jnp.sum(per_row) * jnp.float32(1.0 / N)


def _focal_loss_ref(logits, target, gamma=1.5, ignore_index=-100):
    """Pure-JAX reference mirroring the PyTorch forward."""
    logits = logits.astype(jnp.float32)
    lse = jax.nn.logsumexp(logits, axis=-1)
    safe_tgt = jnp.where(target == ignore_index, 0, target)
    picked = jnp.take_along_axis(logits, safe_tgt[:, None], axis=-1)[:, 0]
    ce = jnp.where(target == ignore_index, 0.0, lse - picked)
    pt = jnp.exp(-ce)
    return jnp.mean((1.0 - pt) ** gamma * ce)


if __name__ == "__main__":
    key = jax.random.PRNGKey(0)
    k1, k2, k3, k4 = jax.random.split(key, 4)

    # Case 1: tiny f32 problem (batch=8, classes=32); exercises the ignore_index path
    # and the default (single-tile) configuration.
    N, C = 8, 32
    logits = jax.random.normal(k1, (N, C), dtype=jnp.float32)
    target = jax.random.randint(k2, (N,), 0, C, dtype=jnp.int32)
    target = target.at[3].set(-100)
    loss = jax.block_until_ready(
        focal_loss(logits, target, gamma=1.5, ignore_index=-100, exp_in_bf16=False))
    ref = _focal_loss_ref(logits, target, gamma=1.5, ignore_index=-100)
    assert jnp.allclose(loss, ref, atol=1e-5, rtol=1e-5), (loss, ref)

    # Case 2: bf16 logits, ragged N (20 rows -> last row-block partially out of bounds)
    # and ragged C (200 with tile_c=128 -> in-kernel column masking + online LSE over
    # two C tiles). No wrapper-side padding of the logits anywhere.
    N2, C2 = 20, 200
    logits2 = jax.random.normal(k3, (N2, C2), dtype=jnp.float32).astype(jnp.bfloat16)
    target2 = jax.random.randint(k4, (N2,), 0, C2, dtype=jnp.int32)
    target2 = target2.at[0].set(-100)
    loss2 = jax.block_until_ready(
        focal_loss(logits2, target2, gamma=1.5, ignore_index=-100,
                   tile_n=8, tile_c=128, exp_in_bf16=False))
    ref2 = _focal_loss_ref(logits2, target2, gamma=1.5, ignore_index=-100)
    assert jnp.allclose(loss2, ref2, atol=1e-4, rtol=1e-4), (loss2, ref2)

    # Case 3: same problem through the bf16-exp fast path (the v7x default for bf16
    # inputs); looser tolerance for the reduced-precision exponentials.
    loss3 = jax.block_until_ready(
        focal_loss(logits2, target2, gamma=1.5, ignore_index=-100,
                   tile_n=8, tile_c=128, exp_in_bf16=True))
    assert jnp.allclose(loss3, ref2, atol=5e-3, rtol=1e-2), (loss3, ref2)

    print("KERNEL_OK")
</pallas_src>

<mosaic_0001>
module attributes {stable_mosaic.version = 11 : i64} {
  func.func @_focal_loss_kernel(%arg0: i32, %arg1: i32, %arg2: memref<8x32xf32, #tpu.memory_space<vmem>>, %arg3: memref<8x1xf32, #tpu.memory_space<vmem>>, %arg4: memref<8x1xf32, #tpu.memory_space<vmem>>, %arg5: memref<8x1xf32, #tpu.memory_space<vmem>>, %arg6: memref<8x1xf32, #tpu.memory_space<vmem>>) attributes {dimension_semantics = [#tpu.dimension_semantics<parallel>, #tpu.dimension_semantics<arbitrary>], iteration_bounds = array<i64: 1, 1>, scalar_prefetch = 0 : i64, scratch_operands = 2 : i64, tpu.core_type = #tpu.core_type<tc>, window_params = [{transform_indices = @transform_0, window_bounds = array<i64: 8, 32>}, {transform_indices = @transform_1, window_bounds = array<i64: 8, 1>}, {transform_indices = @transform_2, window_bounds = array<i64: 8, 1>}]} {
    %c0_i32 = arith.constant 0 : i32
    %0 = arith.cmpi eq, %arg1, %c0_i32 : i32
    %1 = arith.extui %0 : i1 to i32
    %c0_i32_0 = arith.constant 0 : i32
    %2 = arith.cmpi ne, %1, %c0_i32_0 : i32
    scf.if %2 {
      %cst_13 = arith.constant 0xFF800000 : f32
      %23 = vector.broadcast %cst_13 : f32 to vector<8x1xf32>
      %c0_14 = arith.constant 0 : index
      %c0_15 = arith.constant 0 : index
      %24 = vector.load %arg5[%c0_14, %c0_15] : memref<8x1xf32, #tpu.memory_space<vmem>>, vector<8x1xf32>
      tpu.vector_store %arg5[%c0_14, %c0_15], %23 {strides = array<i32>} : memref<8x1xf32, #tpu.memory_space<vmem>>, vector<8x1xf32>,
      %cst_16 = arith.constant 0.000000e+00 : f32
      %25 = vector.broadcast %cst_16 : f32 to vector<8x1xf32>
      %c0_17 = arith.constant 0 : index
      %c0_18 = arith.constant 0 : index
      %26 = vector.load %arg6[%c0_17, %c0_18] : memref<8x1xf32, #tpu.memory_space<vmem>>, vector<8x1xf32>
      tpu.vector_store %arg6[%c0_17, %c0_18], %25 {strides = array<i32>} : memref<8x1xf32, #tpu.memory_space<vmem>>, vector<8x1xf32>,
    } else {
    }
    %c0 = arith.constant 0 : index
    %c0_1 = arith.constant 0 : index
    %3 = vector.load %arg2[%c0, %c0_1] : memref<8x32xf32, #tpu.memory_space<vmem>>, vector<8x32xf32>
    %cst = arith.constant dense<0xFF800000> : vector<8xf32>
    %4 = vector.multi_reduction <maximumf>, %3, %cst [1] : vector<8x32xf32> to vector<8xf32>
    %5 = vector.shape_cast %4 : vector<8xf32> to vector<8x1xf32>
    %c0_2 = arith.constant 0 : index
    %c0_3 = arith.constant 0 : index
    %6 = vector.load %arg5[%c0_2, %c0_3] : memref<8x1xf32, #tpu.memory_space<vmem>>, vector<8x1xf32>
    %7 = arith.maximumf %6, %5 : vector<8x1xf32>
    %8 = arith.subf %6, %7 : vector<8x1xf32>
    %9 = math.exp %8 : vector<8x1xf32>
    %10 = vector.broadcast %7 : vector<8x1xf32> to vector<8x32xf32>
    %11 = arith.subf %3, %10 : vector<8x32xf32>
    %12 = math.exp %11 : vector<8x32xf32>
    %c0_4 = arith.constant 0 : index
    %c0_5 = arith.constant 0 : index
    %13 = vector.load %arg6[%c0_4, %c0_5] : memref<8x1xf32, #tpu.memory_space<vmem>>, vector<8x1xf32>
    %14 = arith.mulf %9, %13 : vector<8x1xf32>
    %cst_6 = arith.constant dense<0.000000e+00> : vector<8xf32>
    %15 = vector.multi_reduction <add>, %12, %cst_6 [1] : vector<8x32xf32> to vector<8xf32>
    %16 = vector.shape_cast %15 : vector<8xf32> to vector<8x1xf32>
    %17 = arith.addf %14, %16 : vector<8x1xf32>
    %c0_7 = arith.constant 0 : index
    %c0_8 = arith.constant 0 : index
    %18 = vector.load %arg6[%c0_7, %c0_8] : memref<8x1xf32, #tpu.memory_space<vmem>>, vector<8x1xf32>
    tpu.vector_store %arg6[%c0_7, %c0_8], %17 {strides = array<i32>} : memref<8x1xf32, #tpu.memory_space<vmem>>, vector<8x1xf32>,
    %c0_9 = arith.constant 0 : index
    %c0_10 = arith.constant 0 : index
    %19 = vector.load %arg5[%c0_9, %c0_10] : memref<8x1xf32, #tpu.memory_space<vmem>>, vector<8x1xf32>
    tpu.vector_store %arg5[%c0_9, %c0_10], %7 {strides = array<i32>} : memref<8x1xf32, #tpu.memory_space<vmem>>, vector<8x1xf32>,
    %c0_i32_11 = arith.constant 0 : i32
    %20 = arith.cmpi eq, %arg1, %c0_i32_11 : i32
    %21 = arith.extui %20 : i1 to i32
    %c0_i32_12 = arith.constant 0 : i32
    %22 = arith.cmpi ne, %21, %c0_i32_12 : i32
    scf.if %22 {
      %c0_13 = arith.constant 0 : index
      %c0_14 = arith.constant 0 : index
      %23 = vector.load %arg6[%c0_13, %c0_14] : memref<8x1xf32, #tpu.memory_space<vmem>>, vector<8x1xf32>
      %24 = math.log %23 : vector<8x1xf32>
      %c0_15 = arith.constant 0 : index
      %c0_16 = arith.constant 0 : index
      %25 = vector.load %arg5[%c0_15, %c0_16] : memref<8x1xf32, #tpu.memory_space<vmem>>, vector<8x1xf32>
      %26 = arith.addf %24, %25 : vector<8x1xf32>
      %c0_17 = arith.constant 0 : index
      %c0_18 = arith.constant 0 : index
      %27 = vector.load %arg3[%c0_17, %c0_18] : memref<8x1xf32, #tpu.memory_space<vmem>>, vector<8x1xf32>
      %28 = arith.subf %26, %27 : vector<8x1xf32>
      %cst_19 = arith.constant 0.000000e+00 : f32
      %29 = vector.broadcast %cst_19 : f32 to vector<8x1xf32>
      %30 = arith.maximumf %28, %29 : vector<8x1xf32>
      %cst_20 = arith.constant 0.000000e+00 : f32
      %31 = vector.broadcast %cst_20 : f32 to vector<8x1xf32>
      %32 = arith.subf %31, %30 : vector<8x1xf32>
      %33 = math.exp %32 : vector<8x1xf32>
      %cst_21 = arith.constant 1.000000e+00 : f32
      %34 = vector.broadcast %cst_21 : f32 to vector<8x1xf32>
      %35 = arith.subf %34, %33 : vector<8x1xf32>
      %36 = math.sqrt %35 : vector<8x1xf32>
      %37 = arith.mulf %35, %36 : vector<8x1xf32>
      %38 = arith.mulf %37, %30 : vector<8x1xf32>
      %c0_22 = arith.constant 0 : index
      %c0_23 = arith.constant 0 : index
      %39 = vector.load %arg4[%c0_22, %c0_23] : memref<8x1xf32, #tpu.memory_space<vmem>>, vector<8x1xf32>
      tpu.vector_store %arg4[%c0_22, %c0_23], %38 {strides = array<i32>} : memref<8x1xf32, #tpu.memory_space<vmem>>, vector<8x1xf32>,
    } else {
    }
    return
  }
  func.func @transform_0(%arg0: i32, %arg1: i32) -> (i32, i32) {
    %c0_i32 = arith.constant 0 : i32
    return %arg0, %arg1 : i32, i32
  }
  func.func @transform_1(%arg0: i32, %arg1: i32) -> (i32, i32) {
    %c0_i32 = arith.constant 0 : i32
    %c0_i32_0 = arith.constant 0 : i32
    return %arg0, %c0_i32 : i32, i32
  }
  func.func @transform_2(%arg0: i32, %arg1: i32) -> (i32, i32) {
    %c0_i32 = arith.constant 0 : i32
    %c0_i32_0 = arith.constant 0 : i32
    return %arg0, %c0_i32 : i32, i32
  }
}

</mosaic_0001>

<llo_original>
// kernel: tpu_custom_call.1
$region0: #{tpu_custom_call.1}
  #allocation0 [shape = 'u32[]', space=smem, size = 0x4, offset = 0x4, fixed_abs, tag = 'smem constant byte address 0x4 - core index']
  #allocation1 [shape = 'u32[72,128]{1,0:T(1,128)}', space=vmem, size = 0x9000, scoped, tag = 'internal scratch']
  #allocation2 [shape = 'f32[8,1]{1,0:T(8,128)}', space=vmem, size = 0x1000, scoped, tag = 'scratch operand']
  #allocation3 [shape = 'f32[8,1]{1,0:T(8,128)}', space=vmem, size = 0x1000, scoped, tag = 'scratch operand']
  %s0 = inlined_call_operand.vmem [shape: f32[8,32], index: 0, kind: input, shape index: {}]
  %s1 = inlined_call_operand.vmem [shape: f32[8,1], index: 1, kind: input, shape index: {}]
  %s2 = inlined_call_operand.vmem [shape: f32[8,1], index: 2, kind: output, shape index: {}]
  %s3 = sld [smem:[#allocation0]]
  $region26: #{tpu_custom_call.1} parent=0
    _
  %s5 = ssub.s32 1, %s3
  %s6 = scalar_select 0, %s5, %s3
  // Predicated region
  $region2: #{tpu_custom_call.1} parent=0 // pred_check
    _
  $region3: #{tpu_custom_call.1} parent=0 // pred_check_branch
    %8 = sbr.rel (0) target = $region5
  $region4: #{tpu_custom_call.1} parent=0 // pred_region
    _
  $region5: #{tpu_custom_call.1} parent=0 // pred_fallthru
    _
  // Predicated region
  $region6: #{tpu_custom_call.1} parent=0 // pred_check
    _
  $region7: #{tpu_custom_call.1} parent=0 // pred_check_branch
    %10 = sbr.rel (0) target = $region9
  $region8: #{tpu_custom_call.1} parent=0 // pred_region
    _
  $region9: #{tpu_custom_call.1} parent=0 // pred_fallthru
    _
  %p11 = scmp.eq.s32.totalorder 0, 0
  // Predicated region
  $region10: #{tpu_custom_call.1} parent=0 // pred_check
    %p12 = pneg %p11
  $region11: #{tpu_custom_call.1} parent=0 // pred_check_branch
    %14 = sbr.rel (%p12) target = $region13
  $region12: #{tpu_custom_call.1} parent=0 // pred_region
    %vm15 = vcmask 7168
    %16 = vst.msk [vmem:[#allocation2] sm:$0xff] %vm15, -inf
    %17 = vst.msk [vmem:[#allocation3] sm:$0xff] %vm15, 0.0
  $region13: #{tpu_custom_call.1} parent=0 // pred_fallthru
    _
  %v18 = vld [vmem:[%s0] sm:$0xff]
  %vm19 = vcmask 261120
  %v20 = vsel %vm19, %v18, -inf
  %21 = vmax.xlane.f32.xlu0 %v20
  %v22 = vpop.xlane.xlu0 %21
  %v23 = vld [vmem:[#allocation2] sm:$0xff]
  %v24 = vmax.f32 %v23, %v22
  %v25 = vsub.f32 %v23, %v24
  %v26 = vmul.f32 %v25, 1.442695
  %v27 = vpow.pop %v26
  %29 = vset.pattern.permute.xlu0 0
  %30 = vperm.xlu0 %29, %v24
  %v31 = vpop.permute.xlu0 %30
  %v33 = vsub.f32 %v18, %v31
  %v34 = vmul.f32 %v33, 1.442695
  %v35 = vpow.pop %v34
  %v36 = vld [vmem:[#allocation3] sm:$0xff]
  %v37 = vmul.f32 %v27, %v36
  %v38 = vsel %vm19, %v35, 0.0
  %39 = vadd.xlane.f32.xlu0 %v38
  %v40 = vpop.xlane.xlu0 %39
  %v41 = vadd.f32 %v37, %v40
  %vm42 = vcmask 7168
  %43 = vst.msk [vmem:[#allocation3] sm:$0xff] %vm42, %v41
  %44 = vst.msk [vmem:[#allocation2] sm:$0xff] %vm42, %v24
  // Predicated region
  $region14: #{tpu_custom_call.1} parent=0 // pred_check
    %p45 = pneg %p11
  $region15: #{tpu_custom_call.1} parent=0 // pred_check_branch
    %47 = sbr.rel (%p45) target = $region17
  $region16: #{tpu_custom_call.1} parent=0 // pred_region
    %v48 = vld [vmem:[#allocation3] sm:$0xff]
    %v49 = vlog2.pop %v48
    %v50 = vmul.f32 %v49, 0.6931472
    %v51 = vld [vmem:[#allocation2] sm:$0xff]
    %v52 = vadd.f32 %v50, %v51
    %v53 = vld [vmem:[%s1] sm:$0xff]
    %v54 = vsub.f32 %v52, %v53
    %v55 = vmax.f32 %v54, 0.0
    %v56 = vsub.f32 0.0, %v55
    %v57 = vmul.f32 %v56, 1.442695
    %v58 = vpow.pop %v57
    %v59 = vsub.f32 1.0, %v58
    %v60 = vrsqrt.pop %v59
    %v61 = vmul.f32 %v60, %v59
    %v62 = vmul.f32 %v61, %v60
    %v63 = vmul.f32 0.5, %v62
    %v64 = vsub.f32 1.5, %v63
    %v65 = vmul.f32 %v60, %v64
    %v66 = vmul.f32 %v59, %v65
    %vm67 = vcmp.eq.f32.partialorder %v59, inf
    %v68 = vsel %vm67, %v59, %v66
    %vm69 = vcmp.eq.f32.partialorder %v59, 0.0
    %v70 = vand.u32 %v59, 2147483648
    %v71 = vsel %vm69, %v70, %v68
    %v72 = vmul.f32 %v59, %v71
    %v73 = vmul.f32 %v72, %v55
    %74 = vst.msk [vmem:[%s2] sm:$0xff] %vm42, %v73
  $region17: #{tpu_custom_call.1} parent=0 // pred_fallthru
    _
  // Predicated region
  $region18: #{tpu_custom_call.1} parent=0 // pred_check
    _
  $region19: #{tpu_custom_call.1} parent=0 // pred_check_branch
    %76 = sbr.rel (0) target = $region21
  $region20: #{tpu_custom_call.1} parent=0 // pred_region
    _
  $region21: #{tpu_custom_call.1} parent=0 // pred_fallthru
    _
  // Predicated region
  $region22: #{tpu_custom_call.1} parent=0 // pred_check
    _
  $region23: #{tpu_custom_call.1} parent=0 // pred_check_branch
    %78 = sbr.rel (0) target = $region25
  $region24: #{tpu_custom_call.1} parent=0 // pred_region
    _
  $region25: #{tpu_custom_call.1} parent=0 // pred_fallthru
    _

</llo_original>
